<compile_context>
chip_gen: v6e
topology: v6e:2x2x1
jax: 0.10.0
libtpu: 0.0.40
codegen_flags: <defaults>
</compile_context>

<pallas_src>
import math

import jax
import jax.numpy as jnp
from jax.experimental import pallas as pl
from jax.experimental.pallas import tpu as pltpu

PI = math.pi


def _round_up(x, m):
    return ((x + m - 1) // m) * m


def _cdiv(a, b):
    return (a + b - 1) // b


# ----------------------------------------------------------------------------
# Pallas tiled matmul kernel: bf16 operands, f32 accumulation directly in the
# output block (resident across the K axis -> no separate acc scratch).
# ----------------------------------------------------------------------------
def _matmul_kernel(a_ref, b_ref, o_ref):
    @pl.when(pl.program_id(1) == 0)
    def _():
        o_ref[...] = jnp.zeros_like(o_ref)

    o_ref[...] += jnp.dot(a_ref[...], b_ref[...],
                          preferred_element_type=jnp.float32)


_TILE_BUDGET_BYTES = 20 * 1024 * 1024   # double-buffered tiles; safe on v7x (64 MiB/TC)
_VMEM_LIMIT_BYTES = 32 * 1024 * 1024    # raises v5e's 16 MiB default, fits all chips
_MAX_TK = 4096


def _num_parallel_n_blocks():
    """2 N blocks when the chip has 2 TensorCores (v7x / megacore), else 1."""
    try:
        kind = jax.devices()[0].device_kind.lower()
    except Exception:
        return 1
    if "v7" in kind or "v4" in kind or "v5p" in kind:
        return 2
    return 1


def _choose_tiles(K, N):
    """Pick (tn, Np, tk, Kp).

    N axis: one block on single-TC chips, two 'parallel' blocks on 2-TC chips.
    K axis: largest tk <= _MAX_TK whose double-buffered bf16 B tile stays within
    the VMEM budget, with K split evenly so padding stays small.
    """
    Np128 = _round_up(N, 128)
    if _num_parallel_n_blocks() >= 2 and Np128 >= 256:
        tn = _round_up(_cdiv(Np128, 2), 128)
        Np = 2 * tn
    else:
        tn = Np128
        Np = Np128
    Kp128 = _round_up(K, 128)
    # B tile dominates VMEM: 2 (double buffer) * tk * tn * 2 bytes (bf16)
    max_tk = max(128, min(_MAX_TK, (_TILE_BUDGET_BYTES // (4 * tn)) // 128 * 128))
    nkb = _cdiv(Kp128, max_tk)
    tk = _round_up(_cdiv(Kp128, nkb), 128)
    Kp = tk * nkb
    return tn, Np, tk, Kp


def pallas_matmul_padded(a_p, b_p, *, tn, tk):
    """(Mp, Kp) bf16 @ (Kp, Np) bf16 -> (Mp, Np) f32. Operands are pre-padded."""
    Mp, Kp = a_p.shape
    Kp2, Np = b_p.shape
    assert Kp == Kp2 and Np % tn == 0 and Kp % tk == 0
    cost = pl.CostEstimate(
        flops=2 * Mp * Kp * Np,
        transcendentals=0,
        bytes_accessed=Mp * Kp * 2 + Kp * Np * 2 + Mp * Np * 4,
    )
    return pl.pallas_call(
        _matmul_kernel,
        out_shape=jax.ShapeDtypeStruct((Mp, Np), jnp.float32),
        grid_spec=pltpu.PrefetchScalarGridSpec(
            num_scalar_prefetch=0,
            grid=(Np // tn, Kp // tk),
            in_specs=[
                pl.BlockSpec((Mp, tk), lambda j, k: (0, k)),
                pl.BlockSpec((tk, tn), lambda j, k: (k, j)),
            ],
            out_specs=pl.BlockSpec((Mp, tn), lambda j, k: (0, j)),
        ),
        compiler_params=pltpu.CompilerParams(
            dimension_semantics=("parallel", "arbitrary"),
            vmem_limit_bytes=_VMEM_LIMIT_BYTES),
        cost_estimate=cost,
    )(a_p, b_p)


# ----------------------------------------------------------------------------
# Buffer construction (plain-JAX glue, mirrors the PyTorch __init__; all index
# and weight math stays in f32 — only the streamed operator is cast to bf16).
# ----------------------------------------------------------------------------
def polar_coord_grid(key, fov, patch_dim, npatch):
    assert 0.0 < fov < PI, f"Invalid FOV: got {fov} rad."
    amp = jnp.tan(jnp.asarray(fov / 2.0, jnp.float32))
    tan_ax = jnp.linspace(-amp, amp, patch_dim)
    tan_y, tan_x = jnp.meshgrid(-tan_ax, tan_ax, indexing="ij")
    theta = jnp.arctan2(tan_x, 1.0)
    phi = jnp.arctan2(tan_y, jnp.sqrt(tan_x ** 2.0 + 1.0))
    k1, k2 = jax.random.split(key)
    # deterministic replacement of torch.rand (no torch RNG state)
    u = 2.0 * PI * jax.random.uniform(k1, (npatch, 1, 1), jnp.float32)
    v = jnp.arcsin(2.0 * jax.random.uniform(k2, (npatch, 1, 1), jnp.float32) - 1.0)
    theta = theta + u
    phi = phi + v
    theta = jnp.where(theta > PI, theta - 2.0 * PI, theta)
    theta = jnp.where(theta < -PI, theta + 2.0 * PI, theta)
    phi = jnp.where(phi > PI / 2.0, phi - PI, phi)
    phi = jnp.where(phi < -PI / 2.0, phi + PI, phi)
    return theta, phi


def grid_sample_matrix(gx, gy, H, W):
    """Dense (P, H*W) bilinear interpolation operator.

    Matches F.grid_sample(mode='bilinear', padding_mode='zeros',
    align_corners=True) for a fixed sampling grid."""
    ix = (gx + 1.0) * 0.5 * (W - 1)
    iy = (gy + 1.0) * 0.5 * (H - 1)
    x0 = jnp.floor(ix)
    y0 = jnp.floor(iy)
    x1 = x0 + 1.0
    y1 = y0 + 1.0
    wx1 = ix - x0
    wx0 = 1.0 - wx1
    wy1 = iy - y0
    wy0 = 1.0 - wy1
    P = gx.shape[0]
    M = jnp.zeros((P, H * W), jnp.float32)

    def add(mat, xc, yc, w):
        valid = (xc >= 0) & (xc <= W - 1) & (yc >= 0) & (yc <= H - 1)
        xi = jnp.clip(xc, 0, W - 1).astype(jnp.int32)
        yi = jnp.clip(yc, 0, H - 1).astype(jnp.int32)
        idx = yi * W + xi
        return mat.at[jnp.arange(P), idx].add(jnp.where(valid, w, 0.0))

    M = add(M, x0, y0, wx0 * wy0)
    M = add(M, x1, y0, wx1 * wy0)
    M = add(M, x0, y1, wx0 * wy1)
    M = add(M, x1, y1, wx1 * wy1)
    return M


def build_scatter_matrix(theta, phi, y_max, x_max):
    """Dense linear operator (J*K, Y*X) equivalent to Scatter2D.forward
    (scatter_mean over x followed by scatter_mean over y)."""
    J = theta.shape[0] * theta.shape[1]          # npatch * patch_dim
    K = theta.shape[2]                           # patch_dim
    x_f = (theta / PI + 1.0) * (x_max - 1) / 2.0
    y_f = (-phi / PI + 0.5) * (y_max - 1)
    x_idx = jnp.round(x_f).astype(jnp.int32).reshape(J, K)
    y_idx = jnp.round(y_f).astype(jnp.int32).reshape(J, K)

    # scatter_mean of data over last dim with index x_idx  -> A1[j, k, x]
    oh_x = (x_idx[:, :, None] == jnp.arange(x_max)[None, None, :]).astype(jnp.int32)
    cnt1 = oh_x.sum(axis=1)                                   # (J, X)
    A1 = oh_x.astype(jnp.float32) / jnp.maximum(cnt1, 1)[:, None, :].astype(jnp.float32)

    # integer scatter_mean (floor div) of y indices, matches torch_scatter
    y_buf = (oh_x * y_idx[:, :, None]).sum(axis=1) // jnp.maximum(cnt1, 1)   # (J, X)

    # scatter_mean over dim=-2 with index y_buf  -> A2[j, x, y]
    oh_y = (y_buf[:, :, None] == jnp.arange(y_max)[None, None, :]).astype(jnp.float32)
    cnt2 = oh_y.sum(axis=0)                                   # (X, Y)
    A2 = oh_y / jnp.maximum(cnt2, 1.0)[None, :, :]

    S = jnp.einsum("jxy,jkx->yxjk", A2, A1)                   # (Y, X, J, K)
    return S.reshape(y_max * x_max, J * K).T                  # (J*K, Y*X)


# ----------------------------------------------------------------------------
# Module
# ----------------------------------------------------------------------------
class ToTangentPatchPallas:
    def __init__(self, fov, patch_dim, npatch, img_h, img_w, key):
        theta, phi = polar_coord_grid(key, fov, patch_dim, npatch)
        self.npatch = npatch
        self.patch_dim = patch_dim
        self.img_h = img_h
        self.img_w = img_w
        self.P = npatch * patch_dim * patch_dim
        # TangentPatch grid (normalized sampling coords), flattened row-major
        self.gx = (theta / PI).reshape(-1)            # (P,)
        self.gy = (-phi / PI * 2.0).reshape(-1)       # (P,)
        # Scatter2D as a fixed dense (P, Y*X) linear operator, kept in f32:
        # only the grid-sample stage runs through bf16 MXU operands.
        self.S = build_scatter_matrix(theta, phi, img_h, img_w)   # (P, Y*X)
        # Cache of (jitted forward, padded bf16 operator) keyed by input (H, W).
        self._fwd_cache = {}
        # Inputs normally arrive at the panorama resolution -> build eagerly.
        self._get_forward(img_h, img_w)

    def _get_forward(self, H, W):
        key = (H, W)
        if key in self._fwd_cache:
            return self._fwd_cache[key]
        # grid_sample as a dense (H*W, P) operator; ONLY this is streamed
        # through the Pallas kernel (perf review #1: the composed Wcomb
        # columns were dropped — the gt rows already hit Wsamp_T here, and the
        # scatter back-projection becomes a tiny f32 follow-up matmul).
        Wsamp_T = grid_sample_matrix(self.gx, self.gy, H, W).T      # (H*W, P)
        K, N = Wsamp_T.shape
        tn, Np, tk, Kp = _choose_tiles(K, N)
        Bop_p = jnp.pad(Wsamp_T, ((0, Kp - K), (0, Np - N))).astype(jnp.bfloat16)
        Bop_p = jax.block_until_ready(Bop_p)     # one-time cost at construction
        P = self.P

        @jax.jit
        def fwd(xb, gt, Bop_p, S):
            B, C, H_, W_ = xb.shape
            M = B * C + B
            Mp = _round_up(max(M, 16), 16)       # bf16 sublane packing
            # Stack xb rows and gt rows -> one launch grid-samples both:
            #   out[:B*C, :P]   = xb_flat @ Wsamp_T   (tangent patches)
            #   out[B*C:M, :P]  = gt_flat @ Wsamp_T   (gt tangent patches)
            a = jnp.concatenate(
                [xb.reshape(B * C, H_ * W_), gt.reshape(B, H_ * W_)], axis=0)
            a_p = jnp.pad(a.astype(jnp.bfloat16),
                          ((0, Mp - M), (0, Kp - H_ * W_)))
            out = pallas_matmul_padded(a_p, Bop_p, tn=tn, tk=tk)   # (Mp, Np) f32
            xb_patch = out[:B * C, :P]
            gt_patch = out[B * C:M, :P]
            gt_scat = gt_patch @ S               # (B, Y*X) f32, negligible cost
            return xb_patch, gt_scat

        entry = (fwd, Bop_p)
        self._fwd_cache[key] = entry
        return entry

    def __call__(self, xb, gt):
        B, C, H, W = xb.shape
        assert gt.shape == (B, H, W)
        fwd, Bop_p = self._get_forward(H, W)
        xb_patch, gt_scat = fwd(xb, gt, Bop_p, self.S)
        xb_patch = xb_patch.reshape(
            B, C, self.npatch, self.patch_dim, self.patch_dim)
        gt_out = gt_scat.reshape(B, self.img_h, self.img_w)
        return xb_patch, gt_out


# ----------------------------------------------------------------------------
if __name__ == "__main__":
    key = jax.random.PRNGKey(0)
    k_grid, k_xb, k_gt = jax.random.split(key, 3)

    B, C, H, W = 2, 4, 16, 16
    fov = PI / 3.0
    patch_dim = 8
    npatch = 4
    img_h, img_w = 16, 16

    xb = jax.random.normal(k_xb, (B, C, H, W), jnp.float32)
    gt = jax.random.normal(k_gt, (B, H, W), jnp.float32)

    model = ToTangentPatchPallas(fov, patch_dim, npatch, img_h, img_w, k_grid)
    xb_patch, gt_out = model(xb, gt)
    jax.block_until_ready((xb_patch, gt_out))

    assert xb_patch.shape == (B, C, npatch, patch_dim, patch_dim)
    assert gt_out.shape == (B, img_h, img_w)

    # sanity: Pallas (bf16-operand, f32-accumulate) vs plain-JAX f32 reference
    # using the same fixed linear operators
    Wsamp_T = grid_sample_matrix(model.gx, model.gy, H, W).T
    xb_ref = (xb.reshape(B * C, H * W) @ Wsamp_T).reshape(
        B, C, npatch, patch_dim, patch_dim)
    gt_ref = ((gt.reshape(B, H * W) @ Wsamp_T) @ model.S).reshape(B, img_h, img_w)
    assert jnp.allclose(xb_patch, xb_ref, atol=2e-2, rtol=2e-2)
    assert jnp.allclose(gt_out, gt_ref, atol=2e-2, rtol=2e-2)

    print("KERNEL_OK")
</pallas_src>

<mosaic_0001>
module attributes {stable_mosaic.version = 11 : i64} {
  func.func @_matmul_kernel(%arg0: i32, %arg1: i32, %arg2: memref<16x256xbf16, #tpu.memory_space<vmem>>, %arg3: memref<256x256xbf16, #tpu.memory_space<vmem>>, %arg4: memref<16x256xf32, #tpu.memory_space<vmem>>) attributes {dimension_semantics = [#tpu.dimension_semantics<parallel>, #tpu.dimension_semantics<arbitrary>], iteration_bounds = array<i64: 1, 1>, scalar_prefetch = 0 : i64, scratch_operands = 0 : i64, tpu.core_type = #tpu.core_type<tc>, window_params = [{transform_indices = @transform_0, window_bounds = array<i64: 16, 256>}, {transform_indices = @transform_1, window_bounds = array<i64: 256, 256>}, {transform_indices = @transform_2, window_bounds = array<i64: 16, 256>}]} {
    %c0_i32 = arith.constant 0 : i32
    %0 = arith.cmpi eq, %arg1, %c0_i32 : i32
    %1 = arith.extui %0 : i1 to i32
    %c0_i32_0 = arith.constant 0 : i32
    %2 = arith.cmpi ne, %1, %c0_i32_0 : i32
    scf.if %2 {
      %cst_8 = arith.constant 0.000000e+00 : f32
      %9 = vector.broadcast %cst_8 : f32 to vector<16x256xf32>
      %c0_9 = arith.constant 0 : index
      %c0_10 = arith.constant 0 : index
      %10 = vector.load %arg4[%c0_9, %c0_10] : memref<16x256xf32, #tpu.memory_space<vmem>>, vector<16x256xf32>
      tpu.vector_store %arg4[%c0_9, %c0_10], %9 {strides = array<i32>} : memref<16x256xf32, #tpu.memory_space<vmem>>, vector<16x256xf32>,
    } else {
    }
    %c0 = arith.constant 0 : index
    %c0_1 = arith.constant 0 : index
    %3 = vector.load %arg4[%c0, %c0_1] : memref<16x256xf32, #tpu.memory_space<vmem>>, vector<16x256xf32>
    %c0_2 = arith.constant 0 : index
    %c0_3 = arith.constant 0 : index
    %4 = vector.load %arg2[%c0_2, %c0_3] : memref<16x256xbf16, #tpu.memory_space<vmem>>, vector<16x256xbf16>
    %c0_4 = arith.constant 0 : index
    %c0_5 = arith.constant 0 : index
    %5 = vector.load %arg3[%c0_4, %c0_5] : memref<256x256xbf16, #tpu.memory_space<vmem>>, vector<256x256xbf16>
    %cst = arith.constant dense<0.000000e+00> : vector<16x256xf32>
    %6 = tpu.matmul %4, %5, %cst {dimension_numbers = #tpu.dot_dimension_numbers<[1], [0], [0], [1], [0, 0, 1, 1], [], []>} : vector<16x256xbf16>, vector<256x256xbf16>, vector<16x256xf32> -> vector<16x256xf32>
    %7 = arith.addf %3, %6 : vector<16x256xf32>
    %c0_6 = arith.constant 0 : index
    %c0_7 = arith.constant 0 : index
    %8 = vector.load %arg4[%c0_6, %c0_7] : memref<16x256xf32, #tpu.memory_space<vmem>>, vector<16x256xf32>
    tpu.vector_store %arg4[%c0_6, %c0_7], %7 {strides = array<i32>} : memref<16x256xf32, #tpu.memory_space<vmem>>, vector<16x256xf32>,
    return
  }
  func.func @transform_0(%arg0: i32, %arg1: i32) -> (i32, i32) {
    %c0_i32 = arith.constant 0 : i32
    %c0_i32_0 = arith.constant 0 : i32
    return %c0_i32, %arg1 : i32, i32
  }
  func.func @transform_1(%arg0: i32, %arg1: i32) -> (i32, i32) {
    %c0_i32 = arith.constant 0 : i32
    return %arg1, %arg0 : i32, i32
  }
  func.func @transform_2(%arg0: i32, %arg1: i32) -> (i32, i32) {
    %c0_i32 = arith.constant 0 : i32
    %c0_i32_0 = arith.constant 0 : i32
    return %c0_i32, %arg0 : i32, i32
  }
}

</mosaic_0001>

<llo_original>
// kernel: fwd.1
$region0: #{fwd.1}
  #allocation0 [shape = 'u32[]', space=smem, size = 0x4, offset = 0x4, fixed_abs, tag = 'smem constant byte address 0x4 - core index']
  #allocation1 [shape = 'u32[144,128]{1,0:T(1,128)}', space=vmem, size = 0x12000, scoped, tag = 'internal scratch']
  %s0 = inlined_call_operand.vmem [shape: bf16[16,256], index: 0, kind: input, shape index: {}]
  %s1 = inlined_call_operand.vmem [shape: bf16[256,256], index: 1, kind: input, shape index: {}]
  %s2 = inlined_call_operand.vmem [shape: f32[16,256], index: 2, kind: output, shape index: {}]
  %s3 = sld [smem:[#allocation0]]
  $region22: #{fwd.1} parent=0
    _
  %s5 = ssub.s32 1, %s3
  %s6 = scalar_select 0, %s5, %s3
  // Predicated region
  $region2: #{fwd.1} parent=0 // pred_check
    _
  $region3: #{fwd.1} parent=0 // pred_check_branch
    %8 = sbr.rel (0) target = $region5
  $region4: #{fwd.1} parent=0 // pred_region
    _
  $region5: #{fwd.1} parent=0 // pred_fallthru
    _
  // Predicated region
  $region6: #{fwd.1} parent=0 // pred_check
    _
  $region7: #{fwd.1} parent=0 // pred_check_branch
    %10 = sbr.rel (0) target = $region9
  $region8: #{fwd.1} parent=0 // pred_region
    _
  $region9: #{fwd.1} parent=0 // pred_fallthru
    _
  %p11 = scmp.eq.s32.totalorder 0, 0
  // Predicated region
  $region10: #{fwd.1} parent=0 // pred_check
    %p12 = pneg %p11
  $region11: #{fwd.1} parent=0 // pred_check_branch
    %14 = sbr.rel (%p12) target = $region13
  $region12: #{fwd.1} parent=0 // pred_region
    %15 = vst [vmem:[%s2] sm:$0xff] 0.0
    %16 = vst [vmem:[%s2 + $0x8] sm:$0xff] 0.0
    %17 = vst [vmem:[%s2 + $0x10] sm:$0xff] 0.0
    %18 = vst [vmem:[%s2 + $0x18] sm:$0xff] 0.0
  $region13: #{fwd.1} parent=0 // pred_fallthru
    _
  %v19 = vld [vmem:[%s2] sm:$0xff]
  %v20 = vld [vmem:[%s2 + $0x8] sm:$0xff]
  %v21 = vld [vmem:[%s2 + $0x10] sm:$0xff]
  %v22 = vld [vmem:[%s2 + $0x18] sm:$0xff]
  %v23 = vld [vmem:[%s0] sm:$0xff]
  %v24 = vld [vmem:[%s0 + $0x8] sm:$0xff]
  %v25 = vld [vmem:[%s1] sm:$0xff]
  %v26 = vld [vmem:[%s1 + $0x8] sm:$0xff]
  %v27 = vld [vmem:[%s1 + $0x10] sm:$0xff]
  %v28 = vld [vmem:[%s1 + $0x18] sm:$0xff]
  %v29 = vld [vmem:[%s1 + $0x20] sm:$0xff]
  %v30 = vld [vmem:[%s1 + $0x28] sm:$0xff]
  %v31 = vld [vmem:[%s1 + $0x30] sm:$0xff]
  %v32 = vld [vmem:[%s1 + $0x38] sm:$0xff]
  %v33 = vld [vmem:[%s1 + $0x40] sm:$0xff]
  %v34 = vld [vmem:[%s1 + $0x48] sm:$0xff]
  %v35 = vld [vmem:[%s1 + $0x50] sm:$0xff]
  %v36 = vld [vmem:[%s1 + $0x58] sm:$0xff]
  %v37 = vld [vmem:[%s1 + $0x60] sm:$0xff]
  %v38 = vld [vmem:[%s1 + $0x68] sm:$0xff]
  %v39 = vld [vmem:[%s1 + $0x70] sm:$0xff]
  %v40 = vld [vmem:[%s1 + $0x78] sm:$0xff]
  %v41 = vld [vmem:[%s1 + $0x80] sm:$0xff]
  %v42 = vld [vmem:[%s1 + $0x88] sm:$0xff]
  %v43 = vld [vmem:[%s1 + $0x90] sm:$0xff]
  %v44 = vld [vmem:[%s1 + $0x98] sm:$0xff]
  %v45 = vld [vmem:[%s1 + $0xa0] sm:$0xff]
  %v46 = vld [vmem:[%s1 + $0xa8] sm:$0xff]
  %v47 = vld [vmem:[%s1 + $0xb0] sm:$0xff]
  %v48 = vld [vmem:[%s1 + $0xb8] sm:$0xff]
  %v49 = vld [vmem:[%s1 + $0xc0] sm:$0xff]
  %v50 = vld [vmem:[%s1 + $0xc8] sm:$0xff]
  %v51 = vld [vmem:[%s1 + $0xd0] sm:$0xff]
  %v52 = vld [vmem:[%s1 + $0xd8] sm:$0xff]
  %v53 = vld [vmem:[%s1 + $0xe0] sm:$0xff]
  %v54 = vld [vmem:[%s1 + $0xe8] sm:$0xff]
  %v55 = vld [vmem:[%s1 + $0xf0] sm:$0xff]
  %v56 = vld [vmem:[%s1 + $0xf8] sm:$0xff]
  %v59 = vunpack.c.l.b16 %v23
  %v60 = vunpack.c.h.b16 %v23
  %v61 = vunpack.c.l.b16 %v24
  %v62 = vunpack.c.h.b16 %v24
  %v63 = vpack.c.b16 %v61, %v59
  %v64 = vpack.c.b16 %v62, %v60
  %v99 = vunpack.c.l.b16 %v25
  %v100 = vunpack.c.h.b16 %v25
  %v101 = vunpack.c.l.b16 %v26
  %v102 = vunpack.c.h.b16 %v26
  %v103 = vunpack.c.l.b16 %v27
  %v104 = vunpack.c.h.b16 %v27
  %v105 = vunpack.c.l.b16 %v28
  %v106 = vunpack.c.h.b16 %v28
  %v107 = vunpack.c.l.b16 %v29
  %v108 = vunpack.c.h.b16 %v29
  %v109 = vunpack.c.l.b16 %v30
  %v110 = vunpack.c.h.b16 %v30
  %v111 = vunpack.c.l.b16 %v31
  %v112 = vunpack.c.h.b16 %v31
  %v113 = vunpack.c.l.b16 %v32
  %v114 = vunpack.c.h.b16 %v32
  %v115 = vunpack.c.l.b16 %v33
  %v116 = vunpack.c.h.b16 %v33
  %v117 = vunpack.c.l.b16 %v34
  %v118 = vunpack.c.h.b16 %v34
  %v119 = vunpack.c.l.b16 %v35
  %v120 = vunpack.c.h.b16 %v35
  %v121 = vunpack.c.l.b16 %v36
  %v122 = vunpack.c.h.b16 %v36
  %v123 = vunpack.c.l.b16 %v37
  %v124 = vunpack.c.h.b16 %v37
  %v125 = vunpack.c.l.b16 %v38
  %v126 = vunpack.c.h.b16 %v38
  %v127 = vunpack.c.l.b16 %v39
  %v128 = vunpack.c.h.b16 %v39
  %v129 = vunpack.c.l.b16 %v40
  %v130 = vunpack.c.h.b16 %v40
  %v131 = vunpack.c.l.b16 %v41
  %v132 = vunpack.c.h.b16 %v41
  %v133 = vunpack.c.l.b16 %v42
  %v134 = vunpack.c.h.b16 %v42
  %v135 = vunpack.c.l.b16 %v43
  %v136 = vunpack.c.h.b16 %v43
  %v137 = vunpack.c.l.b16 %v44
  %v138 = vunpack.c.h.b16 %v44
  %v139 = vunpack.c.l.b16 %v45
  %v140 = vunpack.c.h.b16 %v45
  %v141 = vunpack.c.l.b16 %v46
  %v142 = vunpack.c.h.b16 %v46
  %v143 = vunpack.c.l.b16 %v47
  %v144 = vunpack.c.h.b16 %v47
  %v145 = vunpack.c.l.b16 %v48
  %v146 = vunpack.c.h.b16 %v48
  %v147 = vunpack.c.l.b16 %v49
  %v148 = vunpack.c.h.b16 %v49
  %v149 = vunpack.c.l.b16 %v50
  %v150 = vunpack.c.h.b16 %v50
  %v151 = vunpack.c.l.b16 %v51
  %v152 = vunpack.c.h.b16 %v51
  %v153 = vunpack.c.l.b16 %v52
  %v154 = vunpack.c.h.b16 %v52
  %v155 = vunpack.c.l.b16 %v53
  %v156 = vunpack.c.h.b16 %v53
  %v157 = vunpack.c.l.b16 %v54
  %v158 = vunpack.c.h.b16 %v54
  %v159 = vunpack.c.l.b16 %v55
  %v160 = vunpack.c.h.b16 %v55
  %v161 = vunpack.c.l.b16 %v56
  %v162 = vunpack.c.h.b16 %v56
  %v163 = vpack.c.b16 %v101, %v99
  %v164 = vpack.c.b16 %v102, %v100
  %v165 = vpack.c.b16 %v105, %v103
  %v166 = vpack.c.b16 %v106, %v104
  %v167 = vpack.c.b16 %v109, %v107
  %v168 = vpack.c.b16 %v110, %v108
  %v169 = vpack.c.b16 %v113, %v111
  %v170 = vpack.c.b16 %v114, %v112
  %v171 = vpack.c.b16 %v117, %v115
  %v172 = vpack.c.b16 %v118, %v116
  %v173 = vpack.c.b16 %v121, %v119
  %v174 = vpack.c.b16 %v122, %v120
  %v175 = vpack.c.b16 %v125, %v123
  %v176 = vpack.c.b16 %v126, %v124
  %v177 = vpack.c.b16 %v129, %v127
  %v178 = vpack.c.b16 %v130, %v128
  %v179 = vpack.c.b16 %v133, %v131
  %v180 = vpack.c.b16 %v134, %v132
  %v181 = vpack.c.b16 %v137, %v135
  %v182 = vpack.c.b16 %v138, %v136
  %v183 = vpack.c.b16 %v141, %v139
  %v184 = vpack.c.b16 %v142, %v140
  %v185 = vpack.c.b16 %v145, %v143
  %v186 = vpack.c.b16 %v146, %v144
  %v187 = vpack.c.b16 %v149, %v147
  %v188 = vpack.c.b16 %v150, %v148
  %v189 = vpack.c.b16 %v153, %v151
  %v190 = vpack.c.b16 %v154, %v152
  %v191 = vpack.c.b16 %v157, %v155
  %v192 = vpack.c.b16 %v158, %v156
  %v193 = vpack.c.b16 %v161, %v159
  %v194 = vpack.c.b16 %v162, %v160
  %227 = vmatprep.subr.bf16.mxu0 %v178
  %228 = vmatpush1.bf16.msra.mxu0 %v177
  %229 = vmatprep.subr.bf16.mxu0 %v176
  %230 = vmatpush1.bf16.msra.mxu0 %v175
  %231 = vmatprep.subr.bf16.mxu0 %v174
  %232 = vmatpush1.bf16.msra.mxu0 %v173
  %233 = vmatprep.subr.bf16.mxu0 %v172
  %234 = vmatpush1.bf16.msra.mxu0 %v171
  %235 = vmatprep.subr.bf16.mxu0 %v170
  %236 = vmatpush1.bf16.msra.mxu0 %v169
  %237 = vmatprep.subr.bf16.mxu0 %v168
  %238 = vmatpush1.bf16.msra.mxu0 %v167
  %239 = vmatprep.subr.bf16.mxu0 %v166
  %240 = vmatpush1.bf16.msra.mxu0 %v165
  %241 = vmatprep.subr.bf16.mxu0 %v164
  %242 = vmatpush1.bf16.msra.mxu0 %v163
  %243 = vmatprep.subr.bf16.mxu0 %v194
  %244 = vmatpush2.bf16.msra.mxu0 %v193
  %245 = vmatprep.subr.bf16.mxu0 %v192
  %246 = vmatpush2.bf16.msra.mxu0 %v191
  %247 = vmatprep.subr.bf16.mxu0 %v190
  %248 = vmatpush2.bf16.msra.mxu0 %v189
  %249 = vmatprep.subr.bf16.mxu0 %v188
  %250 = vmatpush2.bf16.msra.mxu0 %v187
  %251 = vmatprep.subr.bf16.mxu0 %v186
  %252 = vmatpush2.bf16.msra.mxu0 %v185
  %253 = vmatprep.subr.bf16.mxu0 %v184
  %254 = vmatpush2.bf16.msra.mxu0 %v183
  %255 = vmatprep.subr.bf16.mxu0 %v182
  %256 = vmatpush2.bf16.msra.mxu0 %v181
  %257 = vmatprep.subr.bf16.mxu0 %v180
  %258 = vmatpush2.bf16.msra.mxu0 %v179
  %259 = vmatprep.mubr.bf16.mxu0 %v64
  %260 = vmatmul.mubr.bf16.gmra.mxu0 %v63
  %v261 = vpop.f32.mrf.mxu0
  %v262 = vadd.f32 0.0, %v261
  %v263 = vpop.f32.mrf.mxu0
  %v264 = vadd.f32 0.0, %v263
  %v265 = vpop.f32.mrf.mxu0
  %v266 = vadd.f32 0.0, %v265
  %v267 = vpop.f32.mrf.mxu0
  %v268 = vadd.f32 0.0, %v267
  %269 = vdwg.mxu0
  %v270 = vadd.f32 %v19, %v262
  %v271 = vadd.f32 %v20, %v264
  %v272 = vadd.f32 %v21, %v266
  %v273 = vadd.f32 %v22, %v268
  %274 = vst [vmem:[%s2] sm:$0xff] %v270
  %275 = vst [vmem:[%s2 + $0x8] sm:$0xff] %v271
  %276 = vst [vmem:[%s2 + $0x10] sm:$0xff] %v272
  %277 = vst [vmem:[%s2 + $0x18] sm:$0xff] %v273
  // Predicated region
  $region14: #{fwd.1} parent=0 // pred_check
    _
  $region15: #{fwd.1} parent=0 // pred_check_branch
    %279 = sbr.rel (0) target = $region17
  $region16: #{fwd.1} parent=0 // pred_region
    _
  $region17: #{fwd.1} parent=0 // pred_fallthru
    _
  // Predicated region
  $region18: #{fwd.1} parent=0 // pred_check
    _
  $region19: #{fwd.1} parent=0 // pred_check_branch
    %281 = sbr.rel (0) target = $region21
  $region20: #{fwd.1} parent=0 // pred_region
    _
  $region21: #{fwd.1} parent=0 // pred_fallthru
    _

</llo_original>
